<compile_context>
chip_gen: v6e
topology: v6e:2x2x1
jax: 0.10.0
libtpu: 0.0.40
codegen_flags: <defaults>
</compile_context>

<pallas_src>
import functools

import jax
import jax.numpy as jnp
import numpy as np
from jax import lax
from jax.experimental import pallas as pl
from jax.experimental.pallas import tpu as pltpu


def _conv_stats_kernel(Hp, Wp, Cin, x_ref, w_ref, y_ref, s1_ref, s2_ref, pad_sc):
    """Per batch element: 2x2 max pool -> 3x3 conv (im2col, single MXU matmul)
    -> flat pre-BN output + per-element BN partial statistics."""
    HW = Hp * Wp

    # ---- 2x2 max pool (in-kernel) -----------------------------------------
    # x_ref block: (1, 2*Hp, Wp, 2*Cin); the last dim packs the two
    # W-neighbours' channels (free bitcast reshape done in the wrapper).
    x = x_ref[0]                                              # (2*Hp, Wp, 2*Cin)
    x = x.reshape(Hp, 2, Wp, 2 * Cin)                         # leading-dim split only
    xh = jnp.max(x, axis=1)                                   # pool over the H pair
    pooled = jnp.maximum(xh[:, :, :Cin], xh[:, :, Cin:])      # pool over the W pair

    # ---- zero-padded (padding=1) tile for the 3x3 conv ---------------------
    # The halo is re-zeroed every step: cheap, and required for correctness
    # when the batch axis is split across TensorCores ("parallel" semantics).
    pad_sc[...] = jnp.zeros((Hp + 2, Wp + 2, Cin), jnp.float32)
    pad_sc[1:Hp + 1, 1:Wp + 1, :] = pooled

    # ---- im2col: one (HW, 9*Cin) x (9*Cin, Cout) matmul on the MXU ----------
    cols = [pad_sc[dy:dy + Hp, dx:dx + Wp, :]
            for dy in range(3) for dx in range(3)]            # 9 x (Hp, Wp, Cin)
    patches = jnp.concatenate(cols, axis=-1).reshape(HW, 9 * Cin)
    acc = jnp.dot(patches, w_ref[...], preferred_element_type=jnp.float32)

    # Conv bias intentionally omitted: it cancels under batch-statistics BN.
    y_ref[0] = acc.astype(y_ref.dtype)                        # flat, lane-dense store

    # ---- per-batch-element BN partial statistics ---------------------------
    s1_ref[0] = jnp.sum(acc, axis=0, keepdims=True)           # (1, Cout)  sum
    s2_ref[0] = jnp.sum(acc * acc, axis=0, keepdims=True)     # (1, Cout)  sum of squares


def _bn_relu_kernel(y_ref, scale_ref, shift_ref, o_ref):
    """Per batch element: y * scale + shift, then ReLU (scale/shift pre-folded)."""
    y = y_ref[0]                                              # (HW, Cout)
    o_ref[0] = jnp.maximum(y * scale_ref[...] + shift_ref[...], 0.0).astype(o_ref.dtype)


def unet_down(x_nchw, w_oihw, conv_bias, gamma, beta, eps=1e-5):
    """UnetDown forward.  x_nchw: (N,Cin,H,W); w_oihw: (Cout,Cin,3,3);
    conv_bias/gamma/beta: (Cout,).  Returns (N, Cout, H//2, W//2).

    conv_bias is accepted for API parity but is a mathematical no-op under
    training-mode BatchNorm (the batch-mean subtraction cancels it exactly).
    """
    del conv_bias
    N, Cin, H, W = x_nchw.shape
    Cout = w_oihw.shape[0]
    Hp, Wp = H // 2, W // 2
    HW = Hp * Wp

    # glue: NCHW -> NHWC, then a free reshape that packs the two W-neighbours'
    # channels onto the lane axis so the kernel can pool without strided loads.
    x_nhwc = jnp.transpose(x_nchw, (0, 2, 3, 1))
    xr = x_nhwc.reshape(N, H, Wp, 2 * Cin).astype(jnp.float32)

    # glue: OIHW -> ((dy*3+dx)*Cin + cin, Cout), matching the im2col column order.
    wcat = jnp.transpose(w_oihw, (2, 3, 1, 0)).reshape(9 * Cin, Cout).astype(jnp.float32)

    cparams = pltpu.CompilerParams(
        dimension_semantics=("parallel",),       # batch axis -> both TCs on v7x
        vmem_limit_bytes=32 * 1024 * 1024,       # explicit; re-derive blocks for real sizes
    )

    # -------- pass 1: pool + conv + per-element BN partial sums -------------
    kernel_a = functools.partial(_conv_stats_kernel, Hp, Wp, Cin)
    y, s1, s2 = pl.pallas_call(
        kernel_a,
        out_shape=(
            jax.ShapeDtypeStruct((N, HW, Cout), jnp.float32),   # pre-BN conv, flat
            jax.ShapeDtypeStruct((N, 1, Cout), jnp.float32),    # per-n sum
            jax.ShapeDtypeStruct((N, 1, Cout), jnp.float32),    # per-n sum of squares
        ),
        grid_spec=pltpu.PrefetchScalarGridSpec(
            num_scalar_prefetch=0,
            grid=(N,),
            in_specs=[
                pl.BlockSpec((1, H, Wp, 2 * Cin), lambda n: (n, 0, 0, 0)),
                pl.BlockSpec((9 * Cin, Cout), lambda n: (0, 0)),
            ],
            out_specs=[
                pl.BlockSpec((1, HW, Cout), lambda n: (n, 0, 0)),
                pl.BlockSpec((1, 1, Cout), lambda n: (n, 0, 0)),
                pl.BlockSpec((1, 1, Cout), lambda n: (n, 0, 0)),
            ],
            scratch_shapes=[pltpu.VMEM((Hp + 2, Wp + 2, Cin), jnp.float32)],
        ),
        compiler_params=cparams,
    )(xr, wcat)

    # -------- tiny O(Cout) reduction + BN affine fold (plain JAX) -----------
    cnt = jnp.float32(N * HW)
    mean = jnp.sum(s1, axis=(0, 1)) / cnt
    var = jnp.sum(s2, axis=(0, 1)) / cnt - mean * mean        # biased var (PyTorch train BN)
    scale = gamma.astype(jnp.float32) * lax.rsqrt(var + eps)
    shift = beta.astype(jnp.float32) - mean * scale

    # -------- pass 2: normalize + ReLU, output blocked per batch element ----
    out_flat = pl.pallas_call(
        _bn_relu_kernel,
        out_shape=jax.ShapeDtypeStruct((N, HW, Cout), x_nchw.dtype),
        grid_spec=pltpu.PrefetchScalarGridSpec(
            num_scalar_prefetch=0,
            grid=(N,),
            in_specs=[
                pl.BlockSpec((1, HW, Cout), lambda n: (n, 0, 0)),
                pl.BlockSpec((1, Cout), lambda n: (0, 0)),
                pl.BlockSpec((1, Cout), lambda n: (0, 0)),
            ],
            out_specs=pl.BlockSpec((1, HW, Cout), lambda n: (n, 0, 0)),
        ),
        compiler_params=cparams,
    )(y, scale.reshape(1, Cout), shift.reshape(1, Cout))

    # glue: free reshape back to spatial shape, then NHWC -> NCHW
    return jnp.transpose(out_flat.reshape(N, Hp, Wp, Cout), (0, 3, 1, 2))


def reference(x_nchw, w_oihw, conv_bias, gamma, beta, eps=1e-5):
    """Pure-JAX reference of UnetDown forward (training-mode BN, WITH conv bias)."""
    N, Cin, H, W = x_nchw.shape
    Cout = w_oihw.shape[0]
    x = jnp.transpose(x_nchw, (0, 2, 3, 1))
    p = jnp.max(x.reshape(N, H // 2, 2, W // 2, 2, Cin), axis=(2, 4))
    w_hwio = jnp.transpose(w_oihw, (2, 3, 1, 0))
    y = lax.conv_general_dilated(
        p, w_hwio, window_strides=(1, 1), padding="SAME",
        dimension_numbers=("NHWC", "HWIO", "NHWC")) + conv_bias.reshape(1, 1, 1, Cout)
    mean = jnp.mean(y, axis=(0, 1, 2), keepdims=True)
    var = jnp.mean((y - mean) ** 2, axis=(0, 1, 2), keepdims=True)
    yn = (y - mean) * lax.rsqrt(var + eps) * gamma.reshape(1, 1, 1, Cout) \
        + beta.reshape(1, 1, 1, Cout)
    return jnp.transpose(jnp.maximum(yn, 0.0), (0, 3, 1, 2))


if __name__ == "__main__":
    N, Cin, H, W, Cout = 2, 4, 16, 16, 8

    key = jax.random.PRNGKey(0)
    k1, k2, k3, k4, k5 = jax.random.split(key, 5)

    # deterministic synthetic parameters (UnetDown(in_ch=4, out_ch=8))
    x_nchw = jax.random.normal(k1, (N, Cin, H, W), jnp.float32)           # NCHW input
    w_pt = 0.1 * jax.random.normal(k2, (Cout, Cin, 3, 3), jnp.float32)    # Conv2d weight OIHW
    conv_b = 0.1 * jax.random.normal(k3, (Cout,), jnp.float32)            # Conv2d bias
    gamma = 1.0 + 0.1 * jax.random.normal(k4, (Cout,), jnp.float32)       # BN weight
    beta = 0.1 * jax.random.normal(k5, (Cout,), jnp.float32)              # BN bias

    out = jax.block_until_ready(unet_down(x_nchw, w_pt, conv_b, gamma, beta))
    ref = jax.block_until_ready(reference(x_nchw, w_pt, conv_b, gamma, beta))

    assert out.shape == (N, Cout, H // 2, W // 2), out.shape
    np.testing.assert_allclose(np.asarray(out), np.asarray(ref), rtol=1e-4, atol=1e-4)

    print("KERNEL_OK")
</pallas_src>

<mosaic_0001>
module attributes {stable_mosaic.version = 11 : i64} {
  func.func @_conv_stats_kernel(%arg0: i32, %arg1: memref<1x16x8x8xf32, #tpu.memory_space<vmem>>, %arg2: memref<36x8xf32, #tpu.memory_space<vmem>>, %arg3: memref<1x64x8xf32, #tpu.memory_space<vmem>>, %arg4: memref<1x1x8xf32, #tpu.memory_space<vmem>>, %arg5: memref<1x1x8xf32, #tpu.memory_space<vmem>>, %arg6: memref<10x10x4xf32, #tpu.memory_space<vmem>>) attributes {dimension_semantics = [#tpu.dimension_semantics<parallel>], iteration_bounds = array<i64: 2>, scalar_prefetch = 0 : i64, scratch_operands = 1 : i64, tpu.core_type = #tpu.core_type<tc>, window_params = [{transform_indices = @transform_0, window_bounds = array<i64: 1, 16, 8, 8>}, {pipeline_mode = #tpu.pipeline_mode<synchronous>, transform_indices = @transform_1, window_bounds = array<i64: 36, 8>}, {transform_indices = @transform_2, window_bounds = array<i64: 1, 64, 8>}, {transform_indices = @transform_3, window_bounds = array<i64: 1, 1, 8>}, {transform_indices = @transform_4, window_bounds = array<i64: 1, 1, 8>}]} {
    %c0 = arith.constant 0 : index
    %c0_0 = arith.constant 0 : index
    %c0_1 = arith.constant 0 : index
    %c0_2 = arith.constant 0 : index
    %0 = vector.load %arg1[%c0, %c0_0, %c0_1, %c0_2] : memref<1x16x8x8xf32, #tpu.memory_space<vmem>>, vector<1x16x8x8xf32>
    %1 = vector.shape_cast %0 : vector<1x16x8x8xf32> to vector<16x8x8xf32>
    %2 = vector.shape_cast %1 : vector<16x8x8xf32> to vector<8x2x8x8xf32>
    %cst = arith.constant dense<0xFF800000> : vector<8x8x8xf32>
    %3 = vector.multi_reduction <maximumf>, %2, %cst [1] : vector<8x2x8x8xf32> to vector<8x8x8xf32>
    %4 = vector.extract_strided_slice %3 {offsets = [0, 0, 0], sizes = [8, 8, 4], strides = [1, 1, 1]} : vector<8x8x8xf32> to vector<8x8x4xf32>
    %5 = vector.extract_strided_slice %3 {offsets = [0, 0, 4], sizes = [8, 8, 4], strides = [1, 1, 1]} : vector<8x8x8xf32> to vector<8x8x4xf32>
    %6 = arith.maximumf %4, %5 : vector<8x8x4xf32>
    %cst_3 = arith.constant 0.000000e+00 : f32
    %7 = vector.broadcast %cst_3 : f32 to vector<10x10x4xf32>
    %c0_4 = arith.constant 0 : index
    %c0_5 = arith.constant 0 : index
    %c0_6 = arith.constant 0 : index
    %8 = vector.load %arg6[%c0_4, %c0_5, %c0_6] : memref<10x10x4xf32, #tpu.memory_space<vmem>>, vector<10x10x4xf32>
    tpu.vector_store %arg6[%c0_4, %c0_5, %c0_6], %7 {strides = array<i32>} : memref<10x10x4xf32, #tpu.memory_space<vmem>>, vector<10x10x4xf32>,
    %c1 = arith.constant 1 : index
    %c1_7 = arith.constant 1 : index
    %c0_8 = arith.constant 0 : index
    %9 = vector.load %arg6[%c1, %c1_7, %c0_8] : memref<10x10x4xf32, #tpu.memory_space<vmem>>, vector<8x8x4xf32>
    tpu.vector_store %arg6[%c1, %c1_7, %c0_8], %6 {strides = array<i32>} : memref<10x10x4xf32, #tpu.memory_space<vmem>>, vector<8x8x4xf32>,
    %c0_9 = arith.constant 0 : index
    %c0_10 = arith.constant 0 : index
    %c0_11 = arith.constant 0 : index
    %10 = vector.load %arg6[%c0_9, %c0_10, %c0_11] : memref<10x10x4xf32, #tpu.memory_space<vmem>>, vector<8x8x4xf32>
    %c0_12 = arith.constant 0 : index
    %c1_13 = arith.constant 1 : index
    %c0_14 = arith.constant 0 : index
    %11 = vector.load %arg6[%c0_12, %c1_13, %c0_14] : memref<10x10x4xf32, #tpu.memory_space<vmem>>, vector<8x8x4xf32>
    %c0_15 = arith.constant 0 : index
    %c2 = arith.constant 2 : index
    %c0_16 = arith.constant 0 : index
    %12 = vector.load %arg6[%c0_15, %c2, %c0_16] : memref<10x10x4xf32, #tpu.memory_space<vmem>>, vector<8x8x4xf32>
    %c1_17 = arith.constant 1 : index
    %c0_18 = arith.constant 0 : index
    %c0_19 = arith.constant 0 : index
    %13 = vector.load %arg6[%c1_17, %c0_18, %c0_19] : memref<10x10x4xf32, #tpu.memory_space<vmem>>, vector<8x8x4xf32>
    %c1_20 = arith.constant 1 : index
    %c1_21 = arith.constant 1 : index
    %c0_22 = arith.constant 0 : index
    %14 = vector.load %arg6[%c1_20, %c1_21, %c0_22] : memref<10x10x4xf32, #tpu.memory_space<vmem>>, vector<8x8x4xf32>
    %c1_23 = arith.constant 1 : index
    %c2_24 = arith.constant 2 : index
    %c0_25 = arith.constant 0 : index
    %15 = vector.load %arg6[%c1_23, %c2_24, %c0_25] : memref<10x10x4xf32, #tpu.memory_space<vmem>>, vector<8x8x4xf32>
    %c2_26 = arith.constant 2 : index
    %c0_27 = arith.constant 0 : index
    %c0_28 = arith.constant 0 : index
    %16 = vector.load %arg6[%c2_26, %c0_27, %c0_28] : memref<10x10x4xf32, #tpu.memory_space<vmem>>, vector<8x8x4xf32>
    %c2_29 = arith.constant 2 : index
    %c1_30 = arith.constant 1 : index
    %c0_31 = arith.constant 0 : index
    %17 = vector.load %arg6[%c2_29, %c1_30, %c0_31] : memref<10x10x4xf32, #tpu.memory_space<vmem>>, vector<8x8x4xf32>
    %c2_32 = arith.constant 2 : index
    %c2_33 = arith.constant 2 : index
    %c0_34 = arith.constant 0 : index
    %18 = vector.load %arg6[%c2_32, %c2_33, %c0_34] : memref<10x10x4xf32, #tpu.memory_space<vmem>>, vector<8x8x4xf32>
    %19 = tpu.concatenate %10, %11, %12, %13, %14, %15, %16, %17, %18 in 2 : vector<8x8x4xf32>, vector<8x8x4xf32>, vector<8x8x4xf32>, vector<8x8x4xf32>, vector<8x8x4xf32>, vector<8x8x4xf32>, vector<8x8x4xf32>, vector<8x8x4xf32>, vector<8x8x4xf32> -> vector<8x8x36xf32>
    %20 = vector.shape_cast %19 : vector<8x8x36xf32> to vector<64x36xf32>
    %c0_35 = arith.constant 0 : index
    %c0_36 = arith.constant 0 : index
    %21 = vector.load %arg2[%c0_35, %c0_36] : memref<36x8xf32, #tpu.memory_space<vmem>>, vector<36x8xf32>
    %cst_37 = arith.constant dense<0.000000e+00> : vector<64x8xf32>
    %22 = tpu.matmul %20, %21, %cst_37 {dimension_numbers = #tpu.dot_dimension_numbers<[1], [0], [0], [1], [0, 0, 1, 1], [], []>} : vector<64x36xf32>, vector<36x8xf32>, vector<64x8xf32> -> vector<64x8xf32>
    %c0_38 = arith.constant 0 : index
    %c0_39 = arith.constant 0 : index
    %c0_40 = arith.constant 0 : index
    %23 = vector.load %arg3[%c0_38, %c0_39, %c0_40] : memref<1x64x8xf32, #tpu.memory_space<vmem>>, vector<1x64x8xf32>
    %24 = vector.shape_cast %23 : vector<1x64x8xf32> to vector<64x8xf32>
    %25 = vector.shape_cast %22 : vector<64x8xf32> to vector<1x64x8xf32>
    tpu.vector_store %arg3[%c0_38, %c0_39, %c0_40], %25 {strides = array<i32>} : memref<1x64x8xf32, #tpu.memory_space<vmem>>, vector<1x64x8xf32>,
    %cst_41 = arith.constant dense<0.000000e+00> : vector<8xf32>
    %26 = vector.multi_reduction <add>, %22, %cst_41 [0] : vector<64x8xf32> to vector<8xf32>
    %27 = vector.shape_cast %26 : vector<8xf32> to vector<1x8xf32>
    %c0_42 = arith.constant 0 : index
    %c0_43 = arith.constant 0 : index
    %c0_44 = arith.constant 0 : index
    %28 = vector.load %arg4[%c0_42, %c0_43, %c0_44] : memref<1x1x8xf32, #tpu.memory_space<vmem>>, vector<1x1x8xf32>
    %29 = vector.shape_cast %28 : vector<1x1x8xf32> to vector<1x8xf32>
    %30 = vector.shape_cast %27 : vector<1x8xf32> to vector<1x1x8xf32>
    tpu.vector_store %arg4[%c0_42, %c0_43, %c0_44], %30 {strides = array<i32>} : memref<1x1x8xf32, #tpu.memory_space<vmem>>, vector<1x1x8xf32>,
    %31 = arith.mulf %22, %22 : vector<64x8xf32>
    %cst_45 = arith.constant dense<0.000000e+00> : vector<8xf32>
    %32 = vector.multi_reduction <add>, %31, %cst_45 [0] : vector<64x8xf32> to vector<8xf32>
    %33 = vector.shape_cast %32 : vector<8xf32> to vector<1x8xf32>
    %c0_46 = arith.constant 0 : index
    %c0_47 = arith.constant 0 : index
    %c0_48 = arith.constant 0 : index
    %34 = vector.load %arg5[%c0_46, %c0_47, %c0_48] : memref<1x1x8xf32, #tpu.memory_space<vmem>>, vector<1x1x8xf32>
    %35 = vector.shape_cast %34 : vector<1x1x8xf32> to vector<1x8xf32>
    %36 = vector.shape_cast %33 : vector<1x8xf32> to vector<1x1x8xf32>
    tpu.vector_store %arg5[%c0_46, %c0_47, %c0_48], %36 {strides = array<i32>} : memref<1x1x8xf32, #tpu.memory_space<vmem>>, vector<1x1x8xf32>,
    return
  }
  func.func @transform_0(%arg0: i32) -> (i32, i32, i32, i32) {
    %c0_i32 = arith.constant 0 : i32
    %c0_i32_0 = arith.constant 0 : i32
    %c0_i32_1 = arith.constant 0 : i32
    %c0_i32_2 = arith.constant 0 : i32
    return %arg0, %c0_i32, %c0_i32_0, %c0_i32_1 : i32, i32, i32, i32
  }
  func.func @transform_1(%arg0: i32) -> (i32, i32) {
    %c0_i32 = arith.constant 0 : i32
    %c0_i32_0 = arith.constant 0 : i32
    %c0_i32_1 = arith.constant 0 : i32
    return %c0_i32, %c0_i32_0 : i32, i32
  }
  func.func @transform_2(%arg0: i32) -> (i32, i32, i32) {
    %c0_i32 = arith.constant 0 : i32
    %c0_i32_0 = arith.constant 0 : i32
    %c0_i32_1 = arith.constant 0 : i32
    return %arg0, %c0_i32, %c0_i32_0 : i32, i32, i32
  }
  func.func @transform_3(%arg0: i32) -> (i32, i32, i32) {
    %c0_i32 = arith.constant 0 : i32
    %c0_i32_0 = arith.constant 0 : i32
    %c0_i32_1 = arith.constant 0 : i32
    return %arg0, %c0_i32, %c0_i32_0 : i32, i32, i32
  }
  func.func @transform_4(%arg0: i32) -> (i32, i32, i32) {
    %c0_i32 = arith.constant 0 : i32
    %c0_i32_0 = arith.constant 0 : i32
    %c0_i32_1 = arith.constant 0 : i32
    return %arg0, %c0_i32, %c0_i32_0 : i32, i32, i32
  }
}

</mosaic_0001>

<llo_original>
// kernel: tpu_custom_call.1
$region0: #{tpu_custom_call.1}
  #allocation0 [shape = 'u32[]', space=smem, size = 0x4, offset = 0x4, fixed_abs, tag = 'smem constant byte address 0x4 - core index']
  #allocation1 [shape = 'u32[144,128]{1,0:T(1,128)}', space=vmem, size = 0x12000, scoped, tag = 'internal scratch']
  #allocation2 [shape = 'f32[10,10,4]{2,1,0:T(8,128)}', space=vmem, size = 0x14000, scoped, tag = 'scratch operand']
  %s0 = inlined_call_operand.vmem [shape: f32[2,16,8,8], index: 0, kind: input, shape index: {}]
  %s1 = inlined_call_operand.vmem [shape: f32[36,8], index: 1, kind: input, shape index: {}]
  %s2 = inlined_call_operand.vmem [shape: f32[2,64,8], index: 2, kind: output, shape index: {0}]
  %s3 = inlined_call_operand.hbm [shape: f32[2,1,8], index: 3, kind: output, shape index: {1}]
  %s4 = inlined_call_operand.hbm [shape: f32[2,1,8], index: 4, kind: output, shape index: {2}]
  %5 = xla_tuple %s2, %s3, %s4
  %s6 = sld [smem:[#allocation0]]
  $region57: #{tpu_custom_call.1} parent=0
    _
  %s8 = ssub.s32 1, %s6
  %s9 = scalar_select 0, %s8, %s6
  $region1: #{tpu_custom_call.1} parent=0
    #allocation3 [shape = 'u8[1024]{0}', space=vmem, size = 0x400, scoped, tag = 'output window, operand 1']
    #allocation4 [shape = 's32[2]{0}', space=sflag, size = 0x8, scoped, tag = 'scoped memory for tpu_custom_call.1']
    #allocation5 [shape = 'u8[1024]{0}', space=vmem, size = 0x400, scoped, tag = 'output window, operand 2']
    #allocation6 [shape = 's32[2]{0}', space=sflag, size = 0x8, scoped, tag = 'scoped memory for tpu_custom_call.1']
    %10 = vsyncpa [#allocation4], 0
    %s11 = scalar_lea.sflag [#allocation4], 1
    %12 = vsyncpa %s11, 0
    %13 = vsyncpa [#allocation6], 0
    %s14 = scalar_lea.sflag [#allocation6], 1
    %15 = vsyncpa %s14, 0
    loop: start=0, step=1, limit=4
    $region2: #{tpu_custom_call.1} parent=1 // loop_pre_header
      _
    $region3: #{tpu_custom_call.1} parent=1 // loop_header
      %s17 = sphi 0, %s21
      %p18 = scmp.ge.s32.totalorder %s17, 4
      %s27 = sphi 0, %s29
      %s30 = sphi 0, %s27
      %s31 = sphi 0, %s30
      %s47 = sphi 0, %s31
      %s51 = sphi 0, %s51
      %s53 = sphi 0, %s51
      %s54 = sphi 0, %s53
      %s68 = sphi 0, %s54
      %s74 = sphi 0, %s76
      %s77 = sphi 0, %s74
      %s78 = sphi 0, %s77
      %s94 = sphi 0, %s78
      %s100 = sphi 0, %s102
      %s103 = sphi 0, %s100
      %s104 = sphi 0, %s103
      %s120 = sphi 0, %s104
      %s126 = sphi 0, %s128
      %s129 = sphi 0, %s126
      %s130 = sphi 0, %s129
      %s146 = sphi 0, %s130
    $region4: #{tpu_custom_call.1} parent=1 // loop_header_branch
      %20 = sbr.rel (%p18) target = $region8
    $region5: #{tpu_custom_call.1} parent=1 // loop_body
      %s22 = ssub.s32 %s17, 1
      %s23 = ssub.s32 %s17, 2
      %s24 = sadd.s32 %s17, 1
      %s25 = ssub.s32 %s17, %s24
      %p26 = scmp.eq.s32.totalorder %s25, 0
      %s28 = sadd.s32 %s27, 1
      %s29 = scalar_select %p26, %s27, %s28
      %p32 = pneg %p26
      %p33 = scmp.eq.s32.totalorder %s17, 1
      %p34 = por %p32, %p33
      %p35 = scmp.ne.s32.totalorder %s27, %s30
      %p36 = scmp.eq.s32.totalorder %s17, 0
      %p37 = por %p35, %p36
      %p38 = scmp.ne.s32.totalorder %s27, %s30
      %p39 = scmp.eq.s32.totalorder %s22, 1
      %p40 = por %p38, %p39
      %p41 = scmp.ne.s32.totalorder %s30, %s31
      %p42 = scmp.eq.s32.totalorder %s22, 0
      %p43 = por %p41, %p42
      %p44 = scmp.ne.s32.totalorder %s30, %s31
      %p45 = scmp.eq.s32.totalorder %s23, 1
      %p46 = por %p44, %p45
      %p48 = scmp.ne.s32.totalorder %s31, %s47
      %p49 = scmp.eq.s32.totalorder %s23, 0
      %p50 = por %p48, %p49
      %s52 = sadd.s32 %s51, 1
      %p55 = scmp.eq.s32.totalorder %s17, 1
      %p56 = scmp.ne.s32.totalorder %s51, %s53
      %p57 = scmp.eq.s32.totalorder %s17, 0
      %p58 = por %p56, %p57
      %p59 = scmp.ne.s32.totalorder %s51, %s53
      %p60 = scmp.eq.s32.totalorder %s22, 1
      %p61 = por %p59, %p60
      %p62 = scmp.ne.s32.totalorder %s53, %s54
      %p63 = scmp.eq.s32.totalorder %s22, 0
      %p64 = por %p62, %p63
      %p65 = scmp.ne.s32.totalorder %s53, %s54
      %p66 = scmp.eq.s32.totalorder %s23, 1
      %p67 = por %p65, %p66
      %p69 = scmp.ne.s32.totalorder %s54, %s68
      %p70 = scmp.eq.s32.totalorder %s23, 0
      %p71 = por %p69, %p70
      %s72 = ssub.s32 %s17, %s24
      %p73 = scmp.eq.s32.totalorder %s72, 0
      %s75 = sadd.s32 %s74, 1
      %s76 = scalar_select %p73, %s74, %s75
      %p79 = pneg %p73
      %p80 = scmp.eq.s32.totalorder %s17, 1
      %p81 = por %p79, %p80
      %p82 = scmp.ne.s32.totalorder %s74, %s77
      %p83 = scmp.eq.s32.totalorder %s17, 0
      %p84 = por %p82, %p83
      %p85 = scmp.ne.s32.totalorder %s74, %s77
      %p86 = scmp.eq.s32.totalorder %s22, 1
      %p87 = por %p85, %p86
      %p88 = scmp.ne.s32.totalorder %s77, %s78
      %p89 = scmp.eq.s32.totalorder %s22, 0
      %p90 = por %p88, %p89
      %p91 = scmp.ne.s32.totalorder %s77, %s78
      %p92 = scmp.eq.s32.totalorder %s23, 1
      %p93 = por %p91, %p92
      %p95 = scmp.ne.s32.totalorder %s78, %s94
      %p96 = scmp.eq.s32.totalorder %s23, 0
      %p97 = por %p95, %p96
      %s98 = ssub.s32 %s17, %s24
      %p99 = scmp.eq.s32.totalorder %s98, 0
      %s101 = sadd.s32 %s100, 1
      %s102 = scalar_select %p99, %s100, %s101
      %p105 = pneg %p99
      %p106 = scmp.eq.s32.totalorder %s17, 1
      %p107 = por %p105, %p106
      %p108 = scmp.ne.s32.totalorder %s100, %s103
      %p109 = scmp.eq.s32.totalorder %s17, 0
      %p110 = por %p108, %p109
      %p111 = scmp.ne.s32.totalorder %s100, %s103
      %p112 = scmp.eq.s32.totalorder %s22, 1
      %p113 = por %p111, %p112
      %p114 = scmp.ne.s32.totalorder %s103, %s104
      %p115 = scmp.eq.s32.totalorder %s22, 0
      %p116 = por %p114, %p115
      %p117 = scmp.ne.s32.totalorder %s103, %s104
      %p118 = scmp.eq.s32.totalorder %s23, 1
      %p119 = por %p117, %p118
      %p121 = scmp.ne.s32.totalorder %s104, %s120
      %p122 = scmp.eq.s32.totalorder %s23, 0
      %p123 = por %p121, %p122
      %s124 = ssub.s32 %s17, %s24
      %p125 = scmp.eq.s32.totalorder %s124, 0
      %s127 = sadd.s32 %s126, 1
      %s128 = scalar_select %p125, %s126, %s127
      %p131 = pneg %p125
      %p132 = scmp.eq.s32.totalorder %s17, 1
      %p133 = por %p131, %p132
      %p134 = scmp.ne.s32.totalorder %s126, %s129
      %p135 = scmp.eq.s32.totalorder %s17, 0
      %p136 = por %p134, %p135
      %p137 = scmp.ne.s32.totalorder %s126, %s129
      %p138 = scmp.eq.s32.totalorder %s22, 1
      %p139 = por %p137, %p138
      %p140 = scmp.ne.s32.totalorder %s129, %s130
      %p141 = scmp.eq.s32.totalorder %s22, 0
      %p142 = por %p140, %p141
      %p143 = scmp.ne.s32.totalorder %s129, %s130
      %p144 = scmp.eq.s32.totalorder %s23, 1
      %p145 = por %p143, %p144
      %p147 = scmp.ne.s32.totalorder %s130, %s146
      %p148 = scmp.eq.s32.totalorder %s23, 0
      %p149 = por %p147, %p148
      %p150 = scmp.le.s32.totalorder 1, %s17
      %p151 = scmp.lt.s32.totalorder %s17, 3
      %p152 = pnand %p150, %p151
      %p153 = pneg %p152
      // Predicated region
      $region9: #{tpu_custom_call.1} parent=5 // pred_check
        _
      $region10: #{tpu_custom_call.1} parent=5 // pred_check_branch
        %155 = sbr.rel (%p152) target = $region12
      $region11: #{tpu_custom_call.1} parent=5 // pred_region
        %s156 = ssub.s32 %s17, 1
        // Predicated region
        $region13: #{tpu_custom_call.1} parent=11 // pred_check
          %p157 = pneg %p64
        $region14: #{tpu_custom_call.1} parent=11 // pred_check_branch
          %159 = sbr.rel (%p157) target = $region16
        $region15: #{tpu_custom_call.1} parent=11 // pred_region
          _
        $region16: #{tpu_custom_call.1} parent=11 // pred_fallthru
          _
      $region12: #{tpu_custom_call.1} parent=5 // pred_fallthru
        _
      %p160 = scmp.lt.s32.totalorder %s17, 2
      // Predicated region
      $region17: #{tpu_custom_call.1} parent=5 // pred_check
        %p161 = pneg %p160
      $region18: #{tpu_custom_call.1} parent=5 // pred_check_branch
        %163 = sbr.rel (%p161) target = $region20
      $region19: #{tpu_custom_call.1} parent=5 // pred_region
        // Predicated region
        $region21: #{tpu_custom_call.1} parent=19 // pred_check
          %p164 = pneg %p37
        $region22: #{tpu_custom_call.1} parent=19 // pred_check_branch
          %166 = sbr.rel (%p164) target = $region24
        $region23: #{tpu_custom_call.1} parent=19 // pred_region
          %p167 = scmp.lt.s32.totalorder %s17, 1
          %s168 = scalar_select %p167, %s17, 1
          %s169 = smul.addr %s168, 16
          %s170 = smul.addr %s169, 8
          %s171 = scalar_lea.vmem %s0, %s170
        $region24: #{tpu_custom_call.1} parent=19 // pred_fallthru
          _
      $region20: #{tpu_custom_call.1} parent=5 // pred_fallthru
        _
      %p172 = scmp.le.s32.totalorder 1, %s17
      %p173 = scmp.lt.s32.totalorder %s17, 3
      %p174 = pnand %p172, %p173
      %p175 = pneg %p174
      // Predicated region
      $region25: #{tpu_custom_call.1} parent=5 // pred_check
        _
      $region26: #{tpu_custom_call.1} parent=5 // pred_check_branch
        %177 = sbr.rel (%p174) target = $region28
      $region27: #{tpu_custom_call.1} parent=5 // pred_region
        %s178 = ssub.s32 %s17, 1
        %p179 = scmp.lt.s32.totalorder %s22, 1
        %s180 = scalar_select %p179, %s22, 1
        %s181 = smul.addr %s180, 16
        %s182 = smul.addr %s181, 8
        %s183 = scalar_lea.vmem %s0, %s182
        %p184 = pneg %p43
        %p185 = pneg %p40
        %p186 = pneg %p64
        %p187 = pneg %p61
        %p188 = pneg %p90
        %p189 = pneg %p87
        %p190 = scmp.lt.s32.totalorder %s22, 1
        %s191 = scalar_select %p190, %s22, 1
        %s192 = smul.addr %s191, 8
        %s193 = smul.addr %s192, 8
        %s194 = scalar_lea.vmem %s2, %s193
        %p195 = pneg %p116
        %p196 = pneg %p113
        %s197 = sand.u32 %s103, 1
        %s198 = scalar_lea.sflag [#allocation4], %s197
        %s199 = sand.u32 %s103, 1
        %s200 = scalar_lea.vmem [#allocation3], %s199
        %p201 = pneg %p142
        %p202 = pneg %p139
        %s203 = sand.u32 %s129, 1
        %s204 = scalar_lea.sflag [#allocation6], %s203
        %s205 = sand.u32 %s129, 1
        %s206 = scalar_lea.vmem [#allocation5], %s205
        %p207 = scmp.lt.s32.totalorder %s22, 1
        %s208 = scalar_select %p207, %s22, 1
        %s209 = smul.addr %s208, 16
        %s210 = smul.addr %s209, 8
        %s211 = scalar_lea.vmem %s0, %s210
        %p212 = scmp.lt.s32.totalorder %s22, 1
        %s213 = scalar_select %p212, %s22, 1
        %s214 = smul.addr %s213, 8
        %s215 = smul.addr %s214, 8
        %s216 = scalar_lea.vmem %s2, %s215
        %v217 = vld [vmem:[%s211] sm:$0xff]
        %v218 = vld [vmem:[%s211 + $0x8] sm:$0xff]
        %v219 = vld [vmem:[%s211 + $0x10] sm:$0xff]
        %v220 = vld [vmem:[%s211 + $0x18] sm:$0xff]
        %v221 = vld [vmem:[%s211 + $0x20] sm:$0xff]
        %v222 = vld [vmem:[%s211 + $0x28] sm:$0xff]
        %v223 = vld [vmem:[%s211 + $0x30] sm:$0xff]
        %v224 = vld [vmem:[%s211 + $0x38] sm:$0xff]
        %v225 = vld [vmem:[%s211 + $0x40] sm:$0xff]
        %v226 = vld [vmem:[%s211 + $0x48] sm:$0xff]
        %v227 = vld [vmem:[%s211 + $0x50] sm:$0xff]
        %v228 = vld [vmem:[%s211 + $0x58] sm:$0xff]
        %v229 = vld [vmem:[%s211 + $0x60] sm:$0xff]
        %v230 = vld [vmem:[%s211 + $0x68] sm:$0xff]
        %v231 = vld [vmem:[%s211 + $0x70] sm:$0xff]
        %v232 = vld [vmem:[%s211 + $0x78] sm:$0xff]
        %vm233 = vcmask 64512
        %v234 = vsel %vm233, %v217, -inf
        %v235 = vsel %vm233, %v218, -inf
        %v236 = vmax.f32 %v234, %v235
        %v237 = vsel %vm233, %v219, -inf
        %v238 = vsel %vm233, %v220, -inf
        %v239 = vmax.f32 %v237, %v238
        %v240 = vsel %vm233, %v221, -inf
        %v241 = vsel %vm233, %v222, -inf
        %v242 = vmax.f32 %v240, %v241
        %v243 = vsel %vm233, %v223, -inf
        %v244 = vsel %vm233, %v224, -inf
        %v245 = vmax.f32 %v243, %v244
        %v246 = vsel %vm233, %v225, -inf
        %v247 = vsel %vm233, %v226, -inf
        %v248 = vmax.f32 %v246, %v247
        %v249 = vsel %vm233, %v227, -inf
        %v250 = vsel %vm233, %v228, -inf
        %v251 = vmax.f32 %v249, %v250
        %v252 = vsel %vm233, %v229, -inf
        %v253 = vsel %vm233, %v230, -inf
        %v254 = vmax.f32 %v252, %v253
        %v255 = vsel %vm233, %v231, -inf
        %v256 = vsel %vm233, %v232, -inf
        %v257 = vmax.f32 %v255, %v256
        %266 = vrot.lane.b32.xlu0 %v236, 124
        %v267 = vpop.permute.xlu0 %266
        %268 = vrot.lane.b32.xlu0 %v239, 124
        %v269 = vpop.permute.xlu0 %268
        %270 = vrot.lane.b32.xlu0 %v242, 124
        %v271 = vpop.permute.xlu0 %270
        %272 = vrot.lane.b32.xlu0 %v245, 124
        %v273 = vpop.permute.xlu0 %272
        %274 = vrot.lane.b32.xlu0 %v248, 124
        %v275 = vpop.permute.xlu0 %274
        %276 = vrot.lane.b32.xlu0 %v251, 124
        %v277 = vpop.permute.xlu0 %276
        %278 = vrot.lane.b32.xlu0 %v254, 124
        %v279 = vpop.permute.xlu0 %278
        %280 = vrot.lane.b32.xlu0 %v257, 124
        %v281 = vpop.permute.xlu0 %280
        %v290 = vmax.f32 %v236, %v267
        %v291 = vmax.f32 %v239, %v269
        %v292 = vmax.f32 %v242, %v271
        %v293 = vmax.f32 %v245, %v273
        %v294 = vmax.f32 %v248, %v275
        %v295 = vmax.f32 %v251, %v277
        %v296 = vmax.f32 %v254, %v279
        %v297 = vmax.f32 %v257, %v281
        %vm298 = vcmask 31744
        %299 = vst.msk [vmem:[#allocation2] sm:$0xff] %vm298, 0.0
        %vm300 = vcmask 25600
        %301 = vst.msk [vmem:[#allocation2 + $0x8] sm:$0x3] %vm300, 0.0
        %302 = vst.msk [vmem:[#allocation2 + $0x10] sm:$0xff] %vm298, 0.0
        %303 = vst.msk [vmem:[#allocation2 + $0x18] sm:$0x3] %vm300, 0.0
        %304 = vst.msk [vmem:[#allocation2 + $0x20] sm:$0xff] %vm298, 0.0
        %305 = vst.msk [vmem:[#allocation2 + $0x28] sm:$0x3] %vm300, 0.0
        %306 = vst.msk [vmem:[#allocation2 + $0x30] sm:$0xff] %vm298, 0.0
        %307 = vst.msk [vmem:[#allocation2 + $0x38] sm:$0x3] %vm300, 0.0
        %308 = vst.msk [vmem:[#allocation2 + $0x40] sm:$0xff] %vm298, 0.0
        %309 = vst.msk [vmem:[#allocation2 + $0x48] sm:$0x3] %vm300, 0.0
        %310 = vst.msk [vmem:[#allocation2 + $0x50] sm:$0xff] %vm298, 0.0
        %311 = vst.msk [vmem:[#allocation2 + $0x58] sm:$0x3] %vm300, 0.0
        %312 = vst.msk [vmem:[#allocation2 + $0x60] sm:$0xff] %vm298, 0.0
        %313 = vst.msk [vmem:[#allocation2 + $0x68] sm:$0x3] %vm300, 0.0
        %314 = vst.msk [vmem:[#allocation2 + $0x70] sm:$0xff] %vm298, 0.0
        %315 = vst.msk [vmem:[#allocation2 + $0x78] sm:$0x3] %vm300, 0.0
        %316 = vst.msk [vmem:[#allocation2 + $0x80] sm:$0xff] %vm298, 0.0
        %317 = vst.msk [vmem:[#allocation2 + $0x88] sm:$0x3] %vm300, 0.0
        %318 = vst.msk [vmem:[#allocation2 + $0x90] sm:$0xff] %vm298, 0.0
        %319 = vst.msk [vmem:[#allocation2 + $0x98] sm:$0x3] %vm300, 0.0
        %s320 = scalar_lea.vmem [#allocation2], 16
        %321 = vst.msk [vmem:[%s320 + $0x1] sm:$0xff] %vm298, %v290
        %322 = vst.msk [vmem:[%s320 + $0x11] sm:$0xff] %vm298, %v291
        %323 = vst.msk [vmem:[%s320 + $0x21] sm:$0xff] %vm298, %v292
        %324 = vst.msk [vmem:[%s320 + $0x31] sm:$0xff] %vm298, %v293
        %325 = vst.msk [vmem:[%s320 + $0x41] sm:$0xff] %vm298, %v294
        %326 = vst.msk [vmem:[%s320 + $0x51] sm:$0xff] %vm298, %v295
        %327 = vst.msk [vmem:[%s320 + $0x61] sm:$0xff] %vm298, %v296
        %328 = vst.msk [vmem:[%s320 + $0x71] sm:$0xff] %vm298, %v297
        %v329 = vld [vmem:[#allocation2] sm:$0xff]
        %v330 = vld [vmem:[#allocation2 + $0x10] sm:$0xff]
        %v331 = vld [vmem:[#allocation2 + $0x20] sm:$0xff]
        %v332 = vld [vmem:[#allocation2 + $0x30] sm:$0xff]
        %v333 = vld [vmem:[#allocation2 + $0x40] sm:$0xff]
        %v334 = vld [vmem:[#allocation2 + $0x50] sm:$0xff]
        %v335 = vld [vmem:[#allocation2 + $0x60] sm:$0xff]
        %v336 = vld [vmem:[#allocation2 + $0x70] sm:$0xff]
        %v337 = vld [vmem:[#allocation2 + $0x1] sm:$0xff]
        %v338 = vld [vmem:[#allocation2 + $0x11] sm:$0xff]
        %v339 = vld [vmem:[#allocation2 + $0x21] sm:$0xff]
        %v340 = vld [vmem:[#allocation2 + $0x31] sm:$0xff]
        %v341 = vld [vmem:[#allocation2 + $0x41] sm:$0xff]
        %v342 = vld [vmem:[#allocation2 + $0x51] sm:$0xff]
        %v343 = vld [vmem:[#allocation2 + $0x61] sm:$0xff]
        %v344 = vld [vmem:[#allocation2 + $0x71] sm:$0xff]
        %v345 = vld [vmem:[#allocation2 + $0x2] sm:$0xff]
        %v346 = vld [vmem:[#allocation2 + $0x12] sm:$0xff]
        %v347 = vld [vmem:[#allocation2 + $0x22] sm:$0xff]
        %v348 = vld [vmem:[#allocation2 + $0x32] sm:$0xff]
        %v349 = vld [vmem:[#allocation2 + $0x42] sm:$0xff]
        %v350 = vld [vmem:[#allocation2 + $0x52] sm:$0xff]
        %v351 = vld [vmem:[#allocation2 + $0x62] sm:$0xff]
        %v352 = vld [vmem:[#allocation2 + $0x72] sm:$0xff]
        %v353 = vld [vmem:[%s320] sm:$0xff]
        %v354 = vld [vmem:[%s320 + $0x10] sm:$0xff]
        %v355 = vld [vmem:[%s320 + $0x20] sm:$0xff]
        %v356 = vld [vmem:[%s320 + $0x30] sm:$0xff]
        %v357 = vld [vmem:[%s320 + $0x40] sm:$0xff]
        %v358 = vld [vmem:[%s320 + $0x50] sm:$0xff]
        %v359 = vld [vmem:[%s320 + $0x60] sm:$0xff]
        %v360 = vld [vmem:[%s320 + $0x70] sm:$0xff]
        %v361 = vld [vmem:[%s320 + $0x1] sm:$0xff]
        %v362 = vld [vmem:[%s320 + $0x11] sm:$0xff]
        %v363 = vld [vmem:[%s320 + $0x21] sm:$0xff]
        %v364 = vld [vmem:[%s320 + $0x31] sm:$0xff]
        %v365 = vld [vmem:[%s320 + $0x41] sm:$0xff]
        %v366 = vld [vmem:[%s320 + $0x51] sm:$0xff]
        %v367 = vld [vmem:[%s320 + $0x61] sm:$0xff]
        %v368 = vld [vmem:[%s320 + $0x71] sm:$0xff]
        %v369 = vld [vmem:[%s320 + $0x2] sm:$0xff]
        %v370 = vld [vmem:[%s320 + $0x12] sm:$0xff]
        %v371 = vld [vmem:[%s320 + $0x22] sm:$0xff]
        %v372 = vld [vmem:[%s320 + $0x32] sm:$0xff]
        %v373 = vld [vmem:[%s320 + $0x42] sm:$0xff]
        %v374 = vld [vmem:[%s320 + $0x52] sm:$0xff]
        %v375 = vld [vmem:[%s320 + $0x62] sm:$0xff]
        %v376 = vld [vmem:[%s320 + $0x72] sm:$0xff]
        %s377 = scalar_lea.vmem [#allocation2], 32
        %v378 = vld [vmem:[%s377] sm:$0xff]
        %v379 = vld [vmem:[%s377 + $0x10] sm:$0xff]
        %v380 = vld [vmem:[%s377 + $0x20] sm:$0xff]
        %v381 = vld [vmem:[%s377 + $0x30] sm:$0xff]
        %v382 = vld [vmem:[%s377 + $0x40] sm:$0xff]
        %v383 = vld [vmem:[%s377 + $0x50] sm:$0xff]
        %v384 = vld [vmem:[%s377 + $0x60] sm:$0xff]
        %v385 = vld [vmem:[%s377 + $0x70] sm:$0xff]
        %v386 = vld [vmem:[%s377 + $0x1] sm:$0xff]
        %v387 = vld [vmem:[%s377 + $0x11] sm:$0xff]
        %v388 = vld [vmem:[%s377 + $0x21] sm:$0xff]
        %v389 = vld [vmem:[%s377 + $0x31] sm:$0xff]
        %v390 = vld [vmem:[%s377 + $0x41] sm:$0xff]
        %v391 = vld [vmem:[%s377 + $0x51] sm:$0xff]
        %v392 = vld [vmem:[%s377 + $0x61] sm:$0xff]
        %v393 = vld [vmem:[%s377 + $0x71] sm:$0xff]
        %v394 = vld [vmem:[%s377 + $0x2] sm:$0xff]
        %v395 = vld [vmem:[%s377 + $0x12] sm:$0xff]
        %v396 = vld [vmem:[%s377 + $0x22] sm:$0xff]
        %v397 = vld [vmem:[%s377 + $0x32] sm:$0xff]
        %v398 = vld [vmem:[%s377 + $0x42] sm:$0xff]
        %v399 = vld [vmem:[%s377 + $0x52] sm:$0xff]
        %v400 = vld [vmem:[%s377 + $0x62] sm:$0xff]
        %v401 = vld [vmem:[%s377 + $0x72] sm:$0xff]
        %410 = vrot.lane.b32.xlu0 %v337, 4
        %v411 = vpop.permute.xlu0 %410
        %412 = vrot.lane.b32.xlu0 %v338, 4
        %v413 = vpop.permute.xlu0 %412
        %414 = vrot.lane.b32.xlu0 %v339, 4
        %v415 = vpop.permute.xlu0 %414
        %416 = vrot.lane.b32.xlu0 %v340, 4
        %v417 = vpop.permute.xlu0 %416
        %418 = vrot.lane.b32.xlu0 %v341, 4
        %v419 = vpop.permute.xlu0 %418
        %420 = vrot.lane.b32.xlu0 %v342, 4
        %v421 = vpop.permute.xlu0 %420
        %422 = vrot.lane.b32.xlu0 %v343, 4
        %v423 = vpop.permute.xlu0 %422
        %424 = vrot.lane.b32.xlu0 %v344, 4
        %v425 = vpop.permute.xlu0 %424
        %442 = vrot.lane.b32.xlu0 %v345, 8
        %v443 = vpop.permute.xlu0 %442
        %444 = vrot.lane.b32.xlu0 %v346, 8
        %v445 = vpop.permute.xlu0 %444
        %446 = vrot.lane.b32.xlu0 %v347, 8
        %v447 = vpop.permute.xlu0 %446
        %448 = vrot.lane.b32.xlu0 %v348, 8
        %v449 = vpop.permute.xlu0 %448
        %450 = vrot.lane.b32.xlu0 %v349, 8
        %v451 = vpop.permute.xlu0 %450
        %452 = vrot.lane.b32.xlu0 %v350, 8
        %v453 = vpop.permute.xlu0 %452
        %454 = vrot.lane.b32.xlu0 %v351, 8
        %v455 = vpop.permute.xlu0 %454
        %456 = vrot.lane.b32.xlu0 %v352, 8
        %v457 = vpop.permute.xlu0 %456
        %474 = vrot.lane.b32.xlu0 %v353, 12
        %v475 = vpop.permute.xlu0 %474
        %476 = vrot.lane.b32.xlu0 %v354, 12
        %v477 = vpop.permute.xlu0 %476
        %478 = vrot.lane.b32.xlu0 %v355, 12
        %v479 = vpop.permute.xlu0 %478
        %480 = vrot.lane.b32.xlu0 %v356, 12
        %v481 = vpop.permute.xlu0 %480
        %482 = vrot.lane.b32.xlu0 %v357, 12
        %v483 = vpop.permute.xlu0 %482
        %484 = vrot.lane.b32.xlu0 %v358, 12
        %v485 = vpop.permute.xlu0 %484
        %486 = vrot.lane.b32.xlu0 %v359, 12
        %v487 = vpop.permute.xlu0 %486
        %488 = vrot.lane.b32.xlu0 %v360, 12
        %v489 = vpop.permute.xlu0 %488
        %506 = vrot.lane.b32.xlu0 %v361, 16
        %v507 = vpop.permute.xlu0 %506
        %508 = vrot.lane.b32.xlu0 %v362, 16
        %v509 = vpop.permute.xlu0 %508
        %510 = vrot.lane.b32.xlu0 %v363, 16
        %v511 = vpop.permute.xlu0 %510
        %512 = vrot.lane.b32.xlu0 %v364, 16
        %v513 = vpop.permute.xlu0 %512
        %514 = vrot.lane.b32.xlu0 %v365, 16
        %v515 = vpop.permute.xlu0 %514
        %516 = vrot.lane.b32.xlu0 %v366, 16
        %v517 = vpop.permute.xlu0 %516
        %518 = vrot.lane.b32.xlu0 %v367, 16
        %v519 = vpop.permute.xlu0 %518
        %520 = vrot.lane.b32.xlu0 %v368, 16
        %v521 = vpop.permute.xlu0 %520
        %538 = vrot.lane.b32.xlu0 %v369, 20
        %v539 = vpop.permute.xlu0 %538
        %540 = vrot.lane.b32.xlu0 %v370, 20
        %v541 = vpop.permute.xlu0 %540
        %542 = vrot.lane.b32.xlu0 %v371, 20
        %v543 = vpop.permute.xlu0 %542
        %544 = vrot.lane.b32.xlu0 %v372, 20
        %v545 = vpop.permute.xlu0 %544
        %546 = vrot.lane.b32.xlu0 %v373, 20
        %v547 = vpop.permute.xlu0 %546
        %548 = vrot.lane.b32.xlu0 %v374, 20
        %v549 = vpop.permute.xlu0 %548
        %550 = vrot.lane.b32.xlu0 %v375, 20
        %v551 = vpop.permute.xlu0 %550
        %552 = vrot.lane.b32.xlu0 %v376, 20
        %v553 = vpop.permute.xlu0 %552
        %570 = vrot.lane.b32.xlu0 %v378, 24
        %v571 = vpop.permute.xlu0 %570
        %572 = vrot.lane.b32.xlu0 %v379, 24
        %v573 = vpop.permute.xlu0 %572
        %574 = vrot.lane.b32.xlu0 %v380, 24
        %v575 = vpop.permute.xlu0 %574
        %576 = vrot.lane.b32.xlu0 %v381, 24
        %v577 = vpop.permute.xlu0 %576
        %578 = vrot.lane.b32.xlu0 %v382, 24
        %v579 = vpop.permute.xlu0 %578
        %580 = vrot.lane.b32.xlu0 %v383, 24
        %v581 = vpop.permute.xlu0 %580
        %582 = vrot.lane.b32.xlu0 %v384, 24
        %v583 = vpop.permute.xlu0 %582
        %584 = vrot.lane.b32.xlu0 %v385, 24
        %v585 = vpop.permute.xlu0 %584
        %602 = vrot.lane.b32.xlu0 %v386, 28
        %v603 = vpop.permute.xlu0 %602
        %604 = vrot.lane.b32.xlu0 %v387, 28
        %v605 = vpop.permute.xlu0 %604
        %606 = vrot.lane.b32.xlu0 %v388, 28
        %v607 = vpop.permute.xlu0 %606
        %608 = vrot.lane.b32.xlu0 %v389, 28
        %v609 = vpop.permute.xlu0 %608
        %610 = vrot.lane.b32.xlu0 %v390, 28
        %v611 = vpop.permute.xlu0 %610
        %612 = vrot.lane.b32.xlu0 %v391, 28
        %v613 = vpop.permute.xlu0 %612
        %614 = vrot.lane.b32.xlu0 %v392, 28
        %v615 = vpop.permute.xlu0 %614
        %616 = vrot.lane.b32.xlu0 %v393, 28
        %v617 = vpop.permute.xlu0 %616
        %634 = vrot.lane.b32.xlu0 %v394, 32
        %v635 = vpop.permute.xlu0 %634
        %636 = vrot.lane.b32.xlu0 %v395, 32
        %v637 = vpop.permute.xlu0 %636
        %638 = vrot.lane.b32.xlu0 %v396, 32
        %v639 = vpop.permute.xlu0 %638
        %640 = vrot.lane.b32.xlu0 %v397, 32
        %v641 = vpop.permute.xlu0 %640
        %642 = vrot.lane.b32.xlu0 %v398, 32
        %v643 = vpop.permute.xlu0 %642
        %644 = vrot.lane.b32.xlu0 %v399, 32
        %v645 = vpop.permute.xlu0 %644
        %646 = vrot.lane.b32.xlu0 %v400, 32
        %v647 = vpop.permute.xlu0 %646
        %648 = vrot.lane.b32.xlu0 %v401, 32
        %v649 = vpop.permute.xlu0 %648
        %v658 = vsel %vm298, %v329, %v411
        %v659 = vsel %vm298, %v330, %v413
        %v660 = vsel %vm298, %v331, %v415
        %v661 = vsel %vm298, %v332, %v417
        %v662 = vsel %vm298, %v333, %v419
        %v663 = vsel %vm298, %v334, %v421
        %v664 = vsel %vm298, %v335, %v423
        %v665 = vsel %vm298, %v336, %v425
        %v666 = vsel %vm233, %v658, %v443
        %v667 = vsel %vm233, %v659, %v445
        %v668 = vsel %vm233, %v660, %v447
        %v669 = vsel %vm233, %v661, %v449
        %v670 = vsel %vm233, %v662, %v451
        %v671 = vsel %vm233, %v663, %v453
        %v672 = vsel %vm233, %v664, %v455
        %v673 = vsel %vm233, %v665, %v457
        %vm674 = vcmask 97280
        %v675 = vsel %vm674, %v666, %v475
        %v676 = vsel %vm674, %v667, %v477
        %v677 = vsel %vm674, %v668, %v479
        %v678 = vsel %vm674, %v669, %v481
        %v679 = vsel %vm674, %v670, %v483
        %v680 = vsel %vm674, %v671, %v485
        %v681 = vsel %vm674, %v672, %v487
        %v682 = vsel %vm674, %v673, %v489
        %vm683 = vcmask 130048
        %v684 = vsel %vm683, %v675, %v507
        %v685 = vsel %vm683, %v676, %v509
        %v686 = vsel %vm683, %v677, %v511
        %v687 = vsel %vm683, %v678, %v513
        %v688 = vsel %vm683, %v679, %v515
        %v689 = vsel %vm683, %v680, %v517
        %v690 = vsel %vm683, %v681, %v519
        %v691 = vsel %vm683, %v682, %v521
        %vm692 = vcmask 162816
        %v693 = vsel %vm692, %v684, %v539
        %v694 = vsel %vm692, %v685, %v541
        %v695 = vsel %vm692, %v686, %v543
        %v696 = vsel %vm692, %v687, %v545
        %v697 = vsel %vm692, %v688, %v547
        %v698 = vsel %vm692, %v689, %v549
        %v699 = vsel %vm692, %v690, %v551
        %v700 = vsel %vm692, %v691, %v553
        %vm701 = vcmask 195584
        %v702 = vsel %vm701, %v693, %v571
        %v703 = vsel %vm701, %v694, %v573
        %v704 = vsel %vm701, %v695, %v575
        %v705 = vsel %vm701, %v696, %v577
        %v706 = vsel %vm701, %v697, %v579
        %v707 = vsel %vm701, %v698, %v581
        %v708 = vsel %vm701, %v699, %v583
        %v709 = vsel %vm701, %v700, %v585
        %vm710 = vcmask 228352
        %v711 = vsel %vm710, %v702, %v603
        %v712 = vsel %vm710, %v703, %v605
        %v713 = vsel %vm710, %v704, %v607
        %v714 = vsel %vm710, %v705, %v609
        %v715 = vsel %vm710, %v706, %v611
        %v716 = vsel %vm710, %v707, %v613
        %v717 = vsel %vm710, %v708, %v615
        %v718 = vsel %vm710, %v709, %v617
        %vm719 = vcmask 261120
        %v720 = vsel %vm719, %v711, %v635
        %v721 = vsel %vm719, %v712, %v637
        %v722 = vsel %vm719, %v713, %v639
        %v723 = vsel %vm719, %v714, %v641
        %v724 = vsel %vm719, %v715, %v643
        %v725 = vsel %vm719, %v716, %v645
        %v726 = vsel %vm719, %v717, %v647
        %v727 = vsel %vm719, %v718, %v649
        %v728 = vld [vmem:[%s1] sm:$0xff]
        %v729 = vld [vmem:[%s1 + $0x8] sm:$0xff]
        %v730 = vld [vmem:[%s1 + $0x10] sm:$0xff]
        %v731 = vld [vmem:[%s1 + $0x18] sm:$0xff]
        %v732 = vld [vmem:[%s1 + $0x20] sm:$0xf]
        %vm733 = vcmask 293888
        %v735 = vsel %vm733, %v720, 0
        %v738 = vsel %vm733, %v721, 0
        %v741 = vsel %vm733, %v722, 0
        %v744 = vsel %vm733, %v723, 0
        %v747 = vsel %vm733, %v724, 0
        %v750 = vsel %vm733, %v725, 0
        %v753 = vsel %vm733, %v726, 0
        %v756 = vsel %vm733, %v727, 0
        %vm758 = vcmask 1043456
        %v760 = vsel %vm758, %v732, 0
        %762 = vmatprep.subr.mxu0 0.0
        %763 = vmatpush1.msra.mxu0 0.0
        %764 = vmatprep.subr.mxu0 0.0
        %765 = vmatpush1.msra.mxu0 0.0
        %766 = vmatprep.subr.mxu0 0.0
        %767 = vmatpush1.msra.mxu0 0.0
        %768 = vmatprep.subr.mxu0 0.0
        %769 = vmatpush1.msra.mxu0 0.0
        %770 = vmatprep.subr.mxu0 0.0
        %771 = vmatpush1.msra.mxu0 0.0
        %772 = vmatprep.subr.mxu0 0.0
        %773 = vmatpush1.msra.mxu0 0.0
        %774 = vmatprep.subr.mxu0 0.0
        %775 = vmatpush1.msra.mxu0 0.0
        %776 = vmatprep.subr.mxu0 0.0
        %777 = vmatpush1.msra.mxu0 0.0
        %778 = vmatprep.subr.mxu0 0.0
        %779 = vmatpush1.msra.mxu0 0.0
        %780 = vmatprep.subr.mxu0 0.0
        %781 = vmatpush1.msra.mxu0 0.0
        %782 = vmatprep.subr.mxu0 0.0
        %783 = vmatpush1.msra.mxu0 0.0
        %784 = vmatprep.subr.mxu0 0.0
        %785 = vmatpush1.msra.mxu0 %v760
        %786 = vmatprep.subr.mxu0 0.0
        %787 = vmatpush1.msra.mxu0 %v731
        %788 = vmatprep.subr.mxu0 0.0
        %789 = vmatpush1.msra.mxu0 %v730
        %790 = vmatprep.subr.mxu0 0.0
        %791 = vmatpush1.msra.mxu0 %v729
        %792 = vmatprep.subr.mxu0 0.0
        %793 = vmatpush1.msra.mxu0 %v728
        %794 = vmatprep.subr.mxu0 0.0
        %795 = vmatpush2.msra.mxu0 0.0
        %796 = vmatprep.subr.mxu0 0.0
        %797 = vmatpush2.msra.mxu0 0.0
        %798 = vmatprep.subr.mxu0 0.0
        %799 = vmatpush2.msra.mxu0 0.0
        %800 = vmatprep.subr.mxu0 0.0
        %801 = vmatpush2.msra.mxu0 0.0
        %802 = vmatprep.subr.mxu0 0.0
        %803 = vmatpush2.msra.mxu0 0.0
        %804 = vmatprep.subr.mxu0 0.0
        %805 = vmatpush2.msra.mxu0 0.0
        %806 = vmatprep.subr.mxu0 0.0
        %807 = vmatpush2.msra.mxu0 0.0
        %808 = vmatprep.subr.mxu0 0.0
        %809 = vmatpush2.msra.mxu0 0.0
        %810 = vmatprep.subr.mxu0 0.0
        %811 = vmatpush2.msra.mxu0 0.0
        %812 = vmatprep.subr.mxu0 0.0
        %813 = vmatpush2.msra.mxu0 0.0
        %814 = vmatprep.subr.mxu0 0.0
        %815 = vmatpush2.msra.mxu0 0.0
        %816 = vmatprep.subr.mxu0 0.0
        %817 = vmatpush2.msra.mxu0 0.0
        %818 = vmatprep.subr.mxu0 0.0
        %819 = vmatpush2.msra.mxu0 0.0
        %820 = vmatprep.subr.mxu0 0.0
        %821 = vmatpush2.msra.mxu0 0.0
        %822 = vmatprep.subr.mxu0 0.0
        %823 = vmatpush2.msra.mxu0 0.0
        %824 = vmatprep.subr.mxu0 0.0
        %825 = vmatpush2.msra.mxu0 0.0
        %826 = vmatprep.mubr.f32.mxu0 0.0
        %827 = vmatmul.mubr.f32.gmra.mxu0 %v735
        %v828 = vpop.f32.mrf.mxu0
        %v829 = vadd.f32 0.0, %v828
        %v830 = vpop.f32.mrf.mxu0
        %831 = vmatprep.mubr.f32.mxu0 0.0
        %832 = vmatmul.mubr.f32.gmra.mxu0 %v738
        %v833 = vpop.f32.mrf.mxu0
        %v834 = vadd.f32 0.0, %v833
        %v835 = vpop.f32.mrf.mxu0
        %836 = vmatprep.mubr.f32.mxu0 0.0
        %837 = vmatmul.mubr.f32.gmra.mxu0 %v741
        %v838 = vpop.f32.mrf.mxu0
        %v839 = vadd.f32 0.0, %v838
        %v840 = vpop.f32.mrf.mxu0
        %841 = vmatprep.mubr.f32.mxu0 0.0
        %842 = vmatmul.mubr.f32.gmra.mxu0 %v744
        %v843 = vpop.f32.mrf.mxu0
        %v844 = vadd.f32 0.0, %v843
        %v845 = vpop.f32.mrf.mxu0
        %846 = vmatprep.mubr.f32.mxu0 0.0
        %847 = vmatmul.mubr.f32.gmra.mxu0 %v747
        %v848 = vpop.f32.mrf.mxu0
        %v849 = vadd.f32 0.0, %v848
        %v850 = vpop.f32.mrf.mxu0
        %851 = vmatprep.mubr.f32.mxu0 0.0
        %852 = vmatmul.mubr.f32.gmra.mxu0 %v750
        %v853 = vpop.f32.mrf.mxu0
        %v854 = vadd.f32 0.0, %v853
        %v855 = vpop.f32.mrf.mxu0
        %856 = vmatprep.mubr.f32.mxu0 0.0
        %857 = vmatmul.mubr.f32.gmra.mxu0 %v753
        %v858 = vpop.f32.mrf.mxu0
        %v859 = vadd.f32 0.0, %v858
        %v860 = vpop.f32.mrf.mxu0
        %861 = vmatprep.mubr.f32.mxu0 0.0
        %862 = vmatmul.mubr.f32.gmra.mxu0 %v756
        %v863 = vpop.f32.mrf.mxu0
        %v864 = vadd.f32 0.0, %v863
        %v865 = vpop.f32.mrf.mxu0
        %866 = vdwg.mxu0
        %867 = vst.msk [vmem:[%s216] sm:$0xff] %vm233, %v829
        %868 = vst.msk [vmem:[%s216 + $0x8] sm:$0xff] %vm233, %v834
        %869 = vst.msk [vmem:[%s216 + $0x10] sm:$0xff] %vm233, %v839
        %870 = vst.msk [vmem:[%s216 + $0x18] sm:$0xff] %vm233, %v844
        %871 = vst.msk [vmem:[%s216 + $0x20] sm:$0xff] %vm233, %v849
        %872 = vst.msk [vmem:[%s216 + $0x28] sm:$0xff] %vm233, %v854
        %873 = vst.msk [vmem:[%s216 + $0x30] sm:$0xff] %vm233, %v859
        %874 = vst.msk [vmem:[%s216 + $0x38] sm:$0xff] %vm233, %v864
        %v875 = vsel %vm233, %v829, 0.0
        %v876 = vsel %vm233, %v834, 0.0
        %v877 = vadd.f32 %v875, %v876
        %v878 = vsel %vm233, %v839, 0.0
        %v879 = vadd.f32 %v877, %v878
        %v880 = vsel %vm233, %v844, 0.0
        %v881 = vadd.f32 %v879, %v880
        %v882 = vsel %vm233, %v849, 0.0
        %v883 = vadd.f32 %v881, %v882
        %v884 = vsel %vm233, %v854, 0.0
        %v885 = vadd.f32 %v883, %v884
        %v886 = vsel %vm233, %v859, 0.0
        %v887 = vadd.f32 %v885, %v886
        %v888 = vsel %vm233, %v864, 0.0
        %v889 = vadd.f32 %v887, %v888
        %v890 = vrot.slane %v889, 4
        %v891 = vadd.f32 %v889, %v890
        %v892 = vrot.slane %v891, 2
        %v893 = vadd.f32 %v891, %v892
        %v894 = vrot.slane %v893, 1
        %v895 = vadd.f32 %v893, %v894
        %vm896 = vcmask 57344
        %897 = vst.msk [vmem:[%s200] sm:$0x1] %vm896, %v895
        %v898 = vmul.f32 %v829, %v829
        %v899 = vmul.f32 %v834, %v834
        %v900 = vmul.f32 %v839, %v839
        %v901 = vmul.f32 %v844, %v844
        %v902 = vmul.f32 %v849, %v849
        %v903 = vmul.f32 %v854, %v854
        %v904 = vmul.f32 %v859, %v859
        %v905 = vmul.f32 %v864, %v864
        %v906 = vsel %vm233, %v898, 0.0
        %v907 = vsel %vm233, %v899, 0.0
        %v908 = vadd.f32 %v906, %v907
        %v909 = vsel %vm233, %v900, 0.0
        %v910 = vadd.f32 %v908, %v909
        %v911 = vsel %vm233, %v901, 0.0
        %v912 = vadd.f32 %v910, %v911
        %v913 = vsel %vm233, %v902, 0.0
        %v914 = vadd.f32 %v912, %v913
        %v915 = vsel %vm233, %v903, 0.0
        %v916 = vadd.f32 %v914, %v915
        %v917 = vsel %vm233, %v904, 0.0
        %v918 = vadd.f32 %v916, %v917
        %v919 = vsel %vm233, %v905, 0.0
        %v920 = vadd.f32 %v918, %v919
        %v921 = vrot.slane %v920, 4
        %v922 = vadd.f32 %v920, %v921
        %v923 = vrot.slane %v922, 2
        %v924 = vadd.f32 %v922, %v923
        %v925 = vrot.slane %v924, 1
        %v926 = vadd.f32 %v924, %v925
        %927 = vst.msk [vmem:[%s206] sm:$0x1] %vm896, %v926
        %p928 = scmp.lt.s32.totalorder %s22, 1
        %s929 = scalar_select %p928, %s22, 1
        %s930 = smul.addr %s929, 8
        %s931 = smul.addr %s930, 8
        %s932 = scalar_lea.vmem %s2, %s931
        %s933 = sand.u32 %s103, 1
        %s934 = scalar_lea.sflag [#allocation4], %s933
        %s935 = sand.u32 %s103, 1
        %s936 = scalar_lea.vmem [#allocation3], %s935
        %s937 = sand.u32 %s129, 1
        %s938 = scalar_lea.sflag [#allocation6], %s937
        %s939 = sand.u32 %s129, 1
        %s940 = scalar_lea.vmem [#allocation5], %s939
        // Predicated region
        $region29: #{tpu_custom_call.1} parent=27 // pred_check
          %p941 = pneg %p87
        $region30: #{tpu_custom_call.1} parent=27 // pred_check_branch
          %943 = sbr.rel (%p941) target = $region32
        $region31: #{tpu_custom_call.1} parent=27 // pred_region
          _
        $region32: #{tpu_custom_call.1} parent=27 // pred_fallthru
          _
        // Predicated region
        $region33: #{tpu_custom_call.1} parent=27 // pred_check
          %p944 = pneg %p113
        $region34: #{tpu_custom_call.1} parent=27 // pred_check_branch
          %946 = sbr.rel (%p944) target = $region36
        $region35: #{tpu_custom_call.1} parent=27 // pred_region
          %s948 = ssub.s32 16, 16
          %949 = vsyncadd %s934, %s948
          %s950 = smul.addr %s22, 16
          %s951 = scalar_lea.hbm %s3, %s950
          %s953 = sshll.u32 %s936, 4
          %s954 = int_to_ptr.vmem [resolvable:$true] %s953
          %956 = dma.vmem_to_hbm [thread:$0]  %s954, 16, %s951, %s934
        $region36: #{tpu_custom_call.1} parent=27 // pred_fallthru
          _
        // Predicated region
        $region37: #{tpu_custom_call.1} parent=27 // pred_check
          %p957 = pneg %p139
        $region38: #{tpu_custom_call.1} parent=27 // pred_check_branch
          %959 = sbr.rel (%p957) target = $region40
        $region39: #{tpu_custom_call.1} parent=27 // pred_region
          %s961 = ssub.s32 16, 16
          %962 = vsyncadd %s938, %s961
          %s963 = smul.addr %s22, 16
          %s964 = scalar_lea.hbm %s4, %s963
          %s966 = sshll.u32 %s940, 4
          %s967 = int_to_ptr.vmem [resolvable:$true] %s966
          %969 = dma.vmem_to_hbm [thread:$0]  %s967, 16, %s964, %s938
        $region40: #{tpu_custom_call.1} parent=27 // pred_fallthru
          _
      $region28: #{tpu_custom_call.1} parent=5 // pred_fallthru
        _
      %p970 = scmp.le.s32.totalorder 2, %s17
      // Predicated region
      $region41: #{tpu_custom_call.1} parent=5 // pred_check
        %p971 = pneg %p970
      $region42: #{tpu_custom_call.1} parent=5 // pred_check_branch
        %973 = sbr.rel (%p971) target = $region44
      $region43: #{tpu_custom_call.1} parent=5 // pred_region
        %s974 = ssub.s32 %s17, 2
        // Predicated region
        $region45: #{tpu_custom_call.1} parent=43 // pred_check
          %p975 = pneg %p93
        $region46: #{tpu_custom_call.1} parent=43 // pred_check_branch
          %977 = sbr.rel (%p975) target = $region48
        $region47: #{tpu_custom_call.1} parent=43 // pred_region
          %p978 = scmp.lt.s32.totalorder %s23, 1
          %s979 = scalar_select %p978, %s23, 1
          %s980 = smul.addr %s979, 8
          %s981 = smul.addr %s980, 8
          %s982 = scalar_lea.vmem %s2, %s981
        $region48: #{tpu_custom_call.1} parent=43 // pred_fallthru
          _
        // Predicated region
        $region49: #{tpu_custom_call.1} parent=43 // pred_check
          %p983 = pneg %p119
        $region50: #{tpu_custom_call.1} parent=43 // pred_check_branch
          %985 = sbr.rel (%p983) target = $region52
        $region51: #{tpu_custom_call.1} parent=43 // pred_region
          %s986 = sand.u32 %s104, 1
          %s987 = scalar_lea.sflag [#allocation4], %s986
          %s988 = sand.u32 %s104, 1
          %s989 = scalar_lea.vmem [#allocation3], %s988
          %990 = dma.done %s987, 16
        $region52: #{tpu_custom_call.1} parent=43 // pred_fallthru
          _
        // Predicated region
        $region53: #{tpu_custom_call.1} parent=43 // pred_check
          %p991 = pneg %p145
        $region54: #{tpu_custom_call.1} parent=43 // pred_check_branch
          %993 = sbr.rel (%p991) target = $region56
        $region55: #{tpu_custom_call.1} parent=43 // pred_region
          %s994 = sand.u32 %s130, 1
          %s995 = scalar_lea.sflag [#allocation6], %s994
          %s996 = sand.u32 %s130, 1
          %s997 = scalar_lea.vmem [#allocation5], %s996
          %998 = dma.done %s995, 16
        $region56: #{tpu_custom_call.1} parent=43 // pred_fallthru
          _
      $region44: #{tpu_custom_call.1} parent=5 // pred_fallthru
        _
    $region6: #{tpu_custom_call.1} parent=1 // loop_footer
      %s21 = sadd.s32 1, %s17
    $region7: #{tpu_custom_call.1} parent=1 // loop_footer_branch
      %16 = sbr.rel target = $region3
    $region8: #{tpu_custom_call.1} parent=1 // loop_exit
      _
    %999 = vsyncpa [#allocation4], 1
    %s1000 = scalar_lea.sflag [#allocation4], 1
    %1001 = vsyncpa %s1000, 1
    %1002 = vsyncpa [#allocation6], 1
    %s1003 = scalar_lea.sflag [#allocation6], 1
    %1004 = vsyncpa %s1003, 1

</llo_original>
